<compile_context>
chip_gen: v7x
topology: tpu7x:2x2x1
jax: 0.10.0
libtpu: 0.0.40
codegen_flags: <defaults>
</compile_context>

<pallas_src>
import jax
import jax.numpy as jnp
from jax.experimental import pallas as pl
from jax.experimental.pallas import tpu as pltpu

_LANE = 128
_SUBLANE = 8


def _round_up(n, m):
    return ((n + m - 1) // m) * m


def _const_index_map(ndim):
    return lambda i: (0,) * ndim


def _make_mlp_kernel(depth, lane_dense_out):
    """Fused MLP over one batch tile; all weights resident in VMEM."""
    n_hidden = depth - 2

    def kernel(*refs):
        it = iter(refs)
        x_ref = next(it)                          # (TB, d_lat_p) activations
        w0_ref = next(it)                         # (d_lat_p, d_pp_p)
        wh_ref = next(it) if n_hidden else None   # (n_hidden, d_pp_p, d_pp_p)
        w_last_ref = next(it)                     # (1, d_pp_p) f32
        b_ref = next(it)                          # (depth, d_pp_p) f32
        o_ref = next(it)

        # Layer 0: MXU matmul (bf16 operands by default), f32 accumulate,
        # f32 bias + ReLU epilogue on the VPU.
        h = x_ref[...]
        w0 = w0_ref[...]
        h = jnp.dot(h.astype(w0.dtype), w0, preferred_element_type=jnp.float32)
        h = jnp.maximum(h + b_ref[0:1, :], 0.0)

        # Hidden layers (statically unrolled, static index into the stack).
        for i in range(n_hidden):
            w = wh_ref[i]
            h = jnp.dot(h.astype(w.dtype), w, preferred_element_type=jnp.float32)
            h = jnp.maximum(h + b_ref[i + 1:i + 2, :], 0.0)

        # Last layer (d_pp -> 1): VPU multiply + XLU lane reduction instead of
        # an N=1 MXU pass; sigmoid rides the EUP.
        w_last = w_last_ref[...]                              # (1, d_pp_p)
        b_last = b_ref[depth - 1:depth, 0:1]                  # (1, 1)
        logit = jnp.sum(h * w_last, axis=-1, keepdims=True) + b_last  # (TB, 1)
        prob = jax.nn.sigmoid(logit)
        if lane_dense_out:
            # (TB,1) -> (1,TB): lane-dense store (unmasked vst), XLU transpose.
            o_ref[0] = prob.T.astype(o_ref.dtype)
        else:
            o_ref[...] = prob.astype(o_ref.dtype)

    return kernel


def property_predictor_forward(x, params, true_prop=None, *,
                               batch_tile=512, weight_dtype=jnp.bfloat16):
    """Pallas port of PropertyPredictor.forward (deep_net path).

    params: list of (W, b) with W shaped (in, out), b shaped (1, out).
    Returns sigmoid(MLP(x)) of shape (B, 1).
    """
    del true_prop  # unused in the deep_net path (parity with PyTorch forward)
    depth = len(params)
    assert depth >= 2, "deep_net path expects depth_pp >= 2"
    assert params[-1][0].shape[1] == 1, "last layer must map to a single output"
    B, d_latent = x.shape
    d_pp = params[0][0].shape[1]

    d_lat_p = _round_up(d_latent, _LANE)
    d_pp_p = _round_up(d_pp, _LANE)
    n_hidden = depth - 2

    def pad2(a, r, c):
        return jnp.pad(a, ((0, r - a.shape[0]), (0, c - a.shape[1])))

    # ---- one-time host-side packing (zero padding is numerically exact) ----
    w0 = pad2(params[0][0].astype(weight_dtype), d_lat_p, d_pp_p)
    w_hidden = None
    if n_hidden:
        w_hidden = jnp.stack(
            [pad2(params[i][0].astype(weight_dtype), d_pp_p, d_pp_p)
             for i in range(1, depth - 1)])
    w_last = pad2(params[-1][0].astype(jnp.float32).T, 1, d_pp_p)

    biases = jnp.zeros((depth, d_pp_p), jnp.float32)
    for i, (_, b) in enumerate(params):
        bvec = jnp.reshape(b, (-1,)).astype(jnp.float32)
        biases = biases.at[i, :bvec.shape[0]].set(bvec)

    const_arrays = [w0] + ([w_hidden] if n_hidden else []) + [w_last, biases]

    # ---- batch tiling (x is the only per-grid-step HBM traffic) ----
    TB = _round_up(max(_SUBLANE, min(batch_tile, _round_up(B, _SUBLANE))),
                   _SUBLANE)
    B_pad = _round_up(B, TB)
    num_tiles = B_pad // TB
    x_p = jnp.pad(x, ((0, B_pad - B), (0, d_lat_p - d_latent))).astype(weight_dtype)

    # ---- VMEM budget (v7x: 64 MiB/TC, weights replicated per core) ----
    nbytes = lambda a: int(a.size) * a.dtype.itemsize
    const_bytes = sum(nbytes(a) for a in const_arrays)
    stream_bytes = 2 * TB * d_lat_p * x_p.dtype.itemsize + 2 * TB * 4
    work_bytes = 3 * TB * d_pp_p * 4
    est_vmem = 2 * const_bytes + stream_bytes + work_bytes  # worst case
    try:
        vmem_cap = int(pltpu.get_tpu_info().vmem_capacity_bytes)
    except Exception:
        vmem_cap = 64 << 20
    vmem_limit = int(min(max(2 * est_vmem, 32 << 20), int(0.85 * vmem_cap)))
    # TODO(synk): if resident weights approach the v7x 64 MiB/TC budget, tile
    #             the d_pp dimension (extra "arbitrary" grid axis) rather than
    #             letting the compiler spill.

    flops = 2 * B_pad * (d_lat_p * d_pp_p + n_hidden * d_pp_p * d_pp_p + d_pp_p)
    cost = pl.CostEstimate(flops=int(flops),
                           transcendentals=int(B_pad),
                           bytes_accessed=int(nbytes(x_p) + const_bytes + B_pad * 4))

    def run(fast):
        kernel = _make_mlp_kernel(depth, lane_dense_out=fast)
        const_kw = dict(pipeline_mode=pl.Buffered(1)) if fast else {}
        in_specs = [pl.BlockSpec((TB, d_lat_p), lambda i: (i, 0))]
        for a in const_arrays:
            in_specs.append(
                pl.BlockSpec(a.shape, _const_index_map(a.ndim), **const_kw))
        if fast:
            out_shape = jax.ShapeDtypeStruct((num_tiles, 1, TB), jnp.float32)
            out_specs = pl.BlockSpec((1, 1, TB), lambda i: (i, 0, 0))
        else:
            out_shape = jax.ShapeDtypeStruct((B_pad, 1), jnp.float32)
            out_specs = pl.BlockSpec((TB, 1), lambda i: (i, 0))
        out = pl.pallas_call(
            kernel,
            out_shape=out_shape,
            grid=(num_tiles,),
            in_specs=in_specs,
            out_specs=out_specs,
            compiler_params=pltpu.CompilerParams(
                dimension_semantics=("parallel",),   # 2 TCs on v7x; no-op elsewhere
                vmem_limit_bytes=vmem_limit),
            cost_estimate=cost,
        )(x_p, *const_arrays)
        out = jax.block_until_ready(out)
        return out.reshape(B_pad, 1) if fast else out

    try:
        out = run(fast=True)
    except Exception:
        # Conservative fallback layout (no Buffered(1), sublane-major output).
        out = run(fast=False)
    return out[:B]


def init_params(key, d_latent, d_pp, depth_pp):
    """Deterministic init mirroring the layer shapes built in __init__."""
    params = []
    for i in range(depth_pp):
        if i == 0:
            fan_in, fan_out = d_latent, d_pp
        elif i == depth_pp - 1:
            fan_in, fan_out = d_pp, 1
        else:
            fan_in, fan_out = d_pp, d_pp
        key, kw, kb = jax.random.split(key, 3)
        bound = 1.0 / jnp.sqrt(fan_in)
        w = jax.random.uniform(kw, (fan_in, fan_out), jnp.float32, -bound, bound)
        b = jax.random.uniform(kb, (1, fan_out), jnp.float32, -bound, bound)
        params.append((w, b))
    return params


def reference_forward(x, params):
    h = x
    for i, (w, b) in enumerate(params):
        h = h @ w + b
        h = jax.nn.sigmoid(h) if i == len(params) - 1 else jnp.maximum(h, 0.0)
    return h


if __name__ == "__main__":
    # Small shapes consistent with the module: one latent vector per example.
    B, d_latent, d_pp, depth_pp = 8, 32, 64, 3

    key = jax.random.PRNGKey(0)
    key, kx = jax.random.split(key)
    x = jax.random.normal(kx, (B, d_latent), jnp.float32)
    true_prop = jnp.zeros((B,), jnp.float32)  # unused (deep_net path)

    params = init_params(key, d_latent, d_pp, depth_pp)
    ref = reference_forward(x, params)

    # Default fast path: bf16 weights + activation stream, f32 accumulation.
    out_bf16 = property_predictor_forward(x, params, true_prop)
    out_bf16 = jax.block_until_ready(out_bf16)
    assert out_bf16.shape == (B, 1), out_bf16.shape
    assert jnp.allclose(out_bf16, ref, atol=3e-2), (
        f"bf16 max err {jnp.max(jnp.abs(out_bf16 - ref))}")

    # Opt-in f32 parity mode (matches the PyTorch f32 reference closely).
    out_f32 = property_predictor_forward(x, params, true_prop,
                                         weight_dtype=jnp.float32)
    out_f32 = jax.block_until_ready(out_f32)
    assert out_f32.shape == (B, 1), out_f32.shape
    assert jnp.allclose(out_f32, ref, atol=1e-3, rtol=1e-3), (
        f"f32 max err {jnp.max(jnp.abs(out_f32 - ref))}")

    print("KERNEL_OK")
</pallas_src>

<mosaic_0001>
module attributes {stable_mosaic.version = 11 : i64} {
  func.func @kernel(%arg0: i32, %arg1: memref<8x128xbf16, #tpu.memory_space<vmem>>, %arg2: memref<128x128xbf16, #tpu.memory_space<vmem>>, %arg3: memref<1x128x128xbf16, #tpu.memory_space<vmem>>, %arg4: memref<1x128xf32, #tpu.memory_space<vmem>>, %arg5: memref<3x128xf32, #tpu.memory_space<vmem>>, %arg6: memref<1x1x8xf32, #tpu.memory_space<vmem>>) attributes {dimension_semantics = [#tpu.dimension_semantics<parallel>], iteration_bounds = array<i64: 1>, scalar_prefetch = 0 : i64, scratch_operands = 0 : i64, tpu.core_type = #tpu.core_type<tc>, window_params = [{transform_indices = @transform_0, window_bounds = array<i64: 8, 128>}, {pipeline_mode = #tpu.pipeline_mode<synchronous>, transform_indices = @transform_1, window_bounds = array<i64: 128, 128>}, {pipeline_mode = #tpu.pipeline_mode<synchronous>, transform_indices = @transform_2, window_bounds = array<i64: 1, 128, 128>}, {pipeline_mode = #tpu.pipeline_mode<synchronous>, transform_indices = @transform_3, window_bounds = array<i64: 1, 128>}, {pipeline_mode = #tpu.pipeline_mode<synchronous>, transform_indices = @transform_4, window_bounds = array<i64: 3, 128>}, {transform_indices = @transform_5, window_bounds = array<i64: 1, 1, 8>}]} {
    %c0 = arith.constant 0 : index
    %c0_0 = arith.constant 0 : index
    %0 = vector.load %arg1[%c0, %c0_0] : memref<8x128xbf16, #tpu.memory_space<vmem>>, vector<8x128xbf16>
    %c0_1 = arith.constant 0 : index
    %c0_2 = arith.constant 0 : index
    %1 = vector.load %arg2[%c0_1, %c0_2] : memref<128x128xbf16, #tpu.memory_space<vmem>>, vector<128x128xbf16>
    %cst = arith.constant dense<0.000000e+00> : vector<8x128xf32>
    %2 = tpu.matmul %0, %1, %cst {dimension_numbers = #tpu.dot_dimension_numbers<[1], [0], [0], [1], [0, 0, 1, 1], [], []>} : vector<8x128xbf16>, vector<128x128xbf16>, vector<8x128xf32> -> vector<8x128xf32>
    %c0_3 = arith.constant 0 : index
    %c0_4 = arith.constant 0 : index
    %3 = vector.load %arg5[%c0_3, %c0_4] : memref<3x128xf32, #tpu.memory_space<vmem>>, vector<1x128xf32>
    %4 = vector.broadcast %3 : vector<1x128xf32> to vector<8x128xf32>
    %5 = arith.addf %2, %4 : vector<8x128xf32>
    %cst_5 = arith.constant 0.000000e+00 : f32
    %6 = vector.broadcast %cst_5 : f32 to vector<8x128xf32>
    %7 = arith.maximumf %5, %6 : vector<8x128xf32>
    %c0_6 = arith.constant 0 : index
    %c0_7 = arith.constant 0 : index
    %c0_8 = arith.constant 0 : index
    %8 = vector.load %arg3[%c0_6, %c0_7, %c0_8] : memref<1x128x128xbf16, #tpu.memory_space<vmem>>, vector<1x128x128xbf16>
    %9 = vector.shape_cast %8 : vector<1x128x128xbf16> to vector<128x128xbf16>
    %10 = arith.truncf %7 : vector<8x128xf32> to vector<8x128xbf16>
    %cst_9 = arith.constant dense<0.000000e+00> : vector<8x128xf32>
    %11 = tpu.matmul %10, %9, %cst_9 {dimension_numbers = #tpu.dot_dimension_numbers<[1], [0], [0], [1], [0, 0, 1, 1], [], []>} : vector<8x128xbf16>, vector<128x128xbf16>, vector<8x128xf32> -> vector<8x128xf32>
    %c1 = arith.constant 1 : index
    %c0_10 = arith.constant 0 : index
    %12 = vector.load %arg5[%c1, %c0_10] : memref<3x128xf32, #tpu.memory_space<vmem>>, vector<1x128xf32>
    %13 = vector.broadcast %12 : vector<1x128xf32> to vector<8x128xf32>
    %14 = arith.addf %11, %13 : vector<8x128xf32>
    %cst_11 = arith.constant 0.000000e+00 : f32
    %15 = vector.broadcast %cst_11 : f32 to vector<8x128xf32>
    %16 = arith.maximumf %14, %15 : vector<8x128xf32>
    %c0_12 = arith.constant 0 : index
    %c0_13 = arith.constant 0 : index
    %17 = vector.load %arg4[%c0_12, %c0_13] : memref<1x128xf32, #tpu.memory_space<vmem>>, vector<1x128xf32>
    %c2 = arith.constant 2 : index
    %c0_14 = arith.constant 0 : index
    %18 = vector.load %arg5[%c2, %c0_14] : memref<3x128xf32, #tpu.memory_space<vmem>>, vector<1x1xf32>
    %19 = vector.broadcast %17 : vector<1x128xf32> to vector<8x128xf32>
    %20 = arith.mulf %16, %19 : vector<8x128xf32>
    %cst_15 = arith.constant dense<0.000000e+00> : vector<8xf32>
    %21 = vector.multi_reduction <add>, %20, %cst_15 [1] : vector<8x128xf32> to vector<8xf32>
    %22 = vector.shape_cast %21 : vector<8xf32> to vector<8x1xf32>
    %23 = vector.broadcast %18 : vector<1x1xf32> to vector<8x1xf32>
    %24 = arith.addf %22, %23 : vector<8x1xf32>
    %25 = arith.negf %24 : vector<8x1xf32>
    %26 = math.exp %25 : vector<8x1xf32>
    %cst_16 = arith.constant 1.000000e+00 : f32
    %27 = vector.broadcast %cst_16 : f32 to vector<8x1xf32>
    %28 = arith.addf %27, %26 : vector<8x1xf32>
    %29 = arith.divf %27, %28 : vector<8x1xf32>
    %30 = tpu.transpose %29, [1, 0] : vector<8x1xf32> -> vector<1x8xf32>
    %c0_17 = arith.constant 0 : index
    %c0_18 = arith.constant 0 : index
    %c0_19 = arith.constant 0 : index
    %31 = vector.load %arg6[%c0_17, %c0_18, %c0_19] : memref<1x1x8xf32, #tpu.memory_space<vmem>>, vector<1x1x8xf32>
    %32 = vector.shape_cast %31 : vector<1x1x8xf32> to vector<1x8xf32>
    %33 = vector.shape_cast %30 : vector<1x8xf32> to vector<1x1x8xf32>
    tpu.vector_store %arg6[%c0_17, %c0_18, %c0_19], %33 {strides = array<i32>} : memref<1x1x8xf32, #tpu.memory_space<vmem>>, vector<1x1x8xf32>,
    return
  }
  func.func @transform_0(%arg0: i32) -> (i32, i32) {
    %c0_i32 = arith.constant 0 : i32
    %c0_i32_0 = arith.constant 0 : i32
    return %arg0, %c0_i32 : i32, i32
  }
  func.func @transform_1(%arg0: i32) -> (i32, i32) {
    %c0_i32 = arith.constant 0 : i32
    %c0_i32_0 = arith.constant 0 : i32
    %c0_i32_1 = arith.constant 0 : i32
    return %c0_i32, %c0_i32_0 : i32, i32
  }
  func.func @transform_2(%arg0: i32) -> (i32, i32, i32) {
    %c0_i32 = arith.constant 0 : i32
    %c0_i32_0 = arith.constant 0 : i32
    %c0_i32_1 = arith.constant 0 : i32
    %c0_i32_2 = arith.constant 0 : i32
    return %c0_i32, %c0_i32_0, %c0_i32_1 : i32, i32, i32
  }
  func.func @transform_3(%arg0: i32) -> (i32, i32) {
    %c0_i32 = arith.constant 0 : i32
    %c0_i32_0 = arith.constant 0 : i32
    %c0_i32_1 = arith.constant 0 : i32
    return %c0_i32, %c0_i32_0 : i32, i32
  }
  func.func @transform_4(%arg0: i32) -> (i32, i32) {
    %c0_i32 = arith.constant 0 : i32
    %c0_i32_0 = arith.constant 0 : i32
    %c0_i32_1 = arith.constant 0 : i32
    return %c0_i32, %c0_i32_0 : i32, i32
  }
  func.func @transform_5(%arg0: i32) -> (i32, i32, i32) {
    %c0_i32 = arith.constant 0 : i32
    %c0_i32_0 = arith.constant 0 : i32
    %c0_i32_1 = arith.constant 0 : i32
    return %arg0, %c0_i32, %c0_i32_0 : i32, i32, i32
  }
}

module attributes {stable_mosaic.version = 11 : i64} {
  func.func @kernel(%arg0: i32, %arg1: memref<8x128xbf16, #tpu.memory_space<vmem>>, %arg2: memref<128x128xbf16, #tpu.memory_space<vmem>>, %arg3: memref<1x128x128xbf16, #tpu.memory_space<vmem>>, %arg4: memref<1x128xf32, #tpu.memory_space<vmem>>, %arg5: memref<3x128xf32, #tpu.memory_space<vmem>>, %arg6: memref<8x1xf32, #tpu.memory_space<vmem>>) attributes {dimension_semantics = [#tpu.dimension_semantics<parallel>], iteration_bounds = array<i64: 1>, scalar_prefetch = 0 : i64, scratch_operands = 0 : i64, tpu.core_type = #tpu.core_type<tc>, window_params = [{transform_indices = @transform_0, window_bounds = array<i64: 8, 128>}, {pipeline_mode = #tpu.pipeline_mode<synchronous>, transform_indices = @transform_1, window_bounds = array<i64: 128, 128>}, {pipeline_mode = #tpu.pipeline_mode<synchronous>, transform_indices = @transform_2, window_bounds = array<i64: 1, 128, 128>}, {pipeline_mode = #tpu.pipeline_mode<synchronous>, transform_indices = @transform_3, window_bounds = array<i64: 1, 128>}, {pipeline_mode = #tpu.pipeline_mode<synchronous>, transform_indices = @transform_4, window_bounds = array<i64: 3, 128>}, {transform_indices = @transform_5, window_bounds = array<i64: 8, 1>}]} {
    %c0 = arith.constant 0 : index
    %c0_0 = arith.constant 0 : index
    %0 = vector.load %arg1[%c0, %c0_0] : memref<8x128xbf16, #tpu.memory_space<vmem>>, vector<8x128xbf16>
    %c0_1 = arith.constant 0 : index
    %c0_2 = arith.constant 0 : index
    %1 = vector.load %arg2[%c0_1, %c0_2] : memref<128x128xbf16, #tpu.memory_space<vmem>>, vector<128x128xbf16>
    %cst = arith.constant dense<0.000000e+00> : vector<8x128xf32>
    %2 = tpu.matmul %0, %1, %cst {dimension_numbers = #tpu.dot_dimension_numbers<[1], [0], [0], [1], [0, 0, 1, 1], [], []>} : vector<8x128xbf16>, vector<128x128xbf16>, vector<8x128xf32> -> vector<8x128xf32>
    %c0_3 = arith.constant 0 : index
    %c0_4 = arith.constant 0 : index
    %3 = vector.load %arg5[%c0_3, %c0_4] : memref<3x128xf32, #tpu.memory_space<vmem>>, vector<1x128xf32>
    %4 = vector.broadcast %3 : vector<1x128xf32> to vector<8x128xf32>
    %5 = arith.addf %2, %4 : vector<8x128xf32>
    %cst_5 = arith.constant 0.000000e+00 : f32
    %6 = vector.broadcast %cst_5 : f32 to vector<8x128xf32>
    %7 = arith.maximumf %5, %6 : vector<8x128xf32>
    %c0_6 = arith.constant 0 : index
    %c0_7 = arith.constant 0 : index
    %c0_8 = arith.constant 0 : index
    %8 = vector.load %arg3[%c0_6, %c0_7, %c0_8] : memref<1x128x128xbf16, #tpu.memory_space<vmem>>, vector<1x128x128xbf16>
    %9 = vector.shape_cast %8 : vector<1x128x128xbf16> to vector<128x128xbf16>
    %10 = arith.truncf %7 : vector<8x128xf32> to vector<8x128xbf16>
    %cst_9 = arith.constant dense<0.000000e+00> : vector<8x128xf32>
    %11 = tpu.matmul %10, %9, %cst_9 {dimension_numbers = #tpu.dot_dimension_numbers<[1], [0], [0], [1], [0, 0, 1, 1], [], []>} : vector<8x128xbf16>, vector<128x128xbf16>, vector<8x128xf32> -> vector<8x128xf32>
    %c1 = arith.constant 1 : index
    %c0_10 = arith.constant 0 : index
    %12 = vector.load %arg5[%c1, %c0_10] : memref<3x128xf32, #tpu.memory_space<vmem>>, vector<1x128xf32>
    %13 = vector.broadcast %12 : vector<1x128xf32> to vector<8x128xf32>
    %14 = arith.addf %11, %13 : vector<8x128xf32>
    %cst_11 = arith.constant 0.000000e+00 : f32
    %15 = vector.broadcast %cst_11 : f32 to vector<8x128xf32>
    %16 = arith.maximumf %14, %15 : vector<8x128xf32>
    %c0_12 = arith.constant 0 : index
    %c0_13 = arith.constant 0 : index
    %17 = vector.load %arg4[%c0_12, %c0_13] : memref<1x128xf32, #tpu.memory_space<vmem>>, vector<1x128xf32>
    %c2 = arith.constant 2 : index
    %c0_14 = arith.constant 0 : index
    %18 = vector.load %arg5[%c2, %c0_14] : memref<3x128xf32, #tpu.memory_space<vmem>>, vector<1x1xf32>
    %19 = vector.broadcast %17 : vector<1x128xf32> to vector<8x128xf32>
    %20 = arith.mulf %16, %19 : vector<8x128xf32>
    %cst_15 = arith.constant dense<0.000000e+00> : vector<8xf32>
    %21 = vector.multi_reduction <add>, %20, %cst_15 [1] : vector<8x128xf32> to vector<8xf32>
    %22 = vector.shape_cast %21 : vector<8xf32> to vector<8x1xf32>
    %23 = vector.broadcast %18 : vector<1x1xf32> to vector<8x1xf32>
    %24 = arith.addf %22, %23 : vector<8x1xf32>
    %25 = arith.negf %24 : vector<8x1xf32>
    %26 = math.exp %25 : vector<8x1xf32>
    %cst_16 = arith.constant 1.000000e+00 : f32
    %27 = vector.broadcast %cst_16 : f32 to vector<8x1xf32>
    %28 = arith.addf %27, %26 : vector<8x1xf32>
    %29 = arith.divf %27, %28 : vector<8x1xf32>
    %c0_17 = arith.constant 0 : index
    %c0_18 = arith.constant 0 : index
    %30 = vector.load %arg6[%c0_17, %c0_18] : memref<8x1xf32, #tpu.memory_space<vmem>>, vector<8x1xf32>
    tpu.vector_store %arg6[%c0_17, %c0_18], %29 {strides = array<i32>} : memref<8x1xf32, #tpu.memory_space<vmem>>, vector<8x1xf32>,
    return
  }
  func.func @transform_0(%arg0: i32) -> (i32, i32) {
    %c0_i32 = arith.constant 0 : i32
    %c0_i32_0 = arith.constant 0 : i32
    return %arg0, %c0_i32 : i32, i32
  }
  func.func @transform_1(%arg0: i32) -> (i32, i32) {
    %c0_i32 = arith.constant 0 : i32
    %c0_i32_0 = arith.constant 0 : i32
    %c0_i32_1 = arith.constant 0 : i32
    return %c0_i32, %c0_i32_0 : i32, i32
  }
  func.func @transform_2(%arg0: i32) -> (i32, i32, i32) {
    %c0_i32 = arith.constant 0 : i32
    %c0_i32_0 = arith.constant 0 : i32
    %c0_i32_1 = arith.constant 0 : i32
    %c0_i32_2 = arith.constant 0 : i32
    return %c0_i32, %c0_i32_0, %c0_i32_1 : i32, i32, i32
  }
  func.func @transform_3(%arg0: i32) -> (i32, i32) {
    %c0_i32 = arith.constant 0 : i32
    %c0_i32_0 = arith.constant 0 : i32
    %c0_i32_1 = arith.constant 0 : i32
    return %c0_i32, %c0_i32_0 : i32, i32
  }
  func.func @transform_4(%arg0: i32) -> (i32, i32) {
    %c0_i32 = arith.constant 0 : i32
    %c0_i32_0 = arith.constant 0 : i32
    %c0_i32_1 = arith.constant 0 : i32
    return %c0_i32, %c0_i32_0 : i32, i32
  }
  func.func @transform_5(%arg0: i32) -> (i32, i32) {
    %c0_i32 = arith.constant 0 : i32
    %c0_i32_0 = arith.constant 0 : i32
    return %arg0, %c0_i32 : i32, i32
  }
}

</mosaic_0001>

<llo_original>
// kernel: tpu_custom_call.1
$region0: #{tpu_custom_call.1}
  #allocation0 [shape = 'u32[]', space=smem, size = 0x4, offset = 0x4, fixed_abs, tag = 'smem constant byte address 0x4 - core index']
  #allocation1 [shape = 'u32[144,128]{1,0:T(1,128)}', space=vmem, size = 0x12000, scoped, tag = 'internal scratch']
  %s0 = inlined_call_operand.hbm [shape: bf16[8,128], index: 0, kind: input, shape index: {}]
  %s1 = inlined_call_operand.hbm [shape: bf16[128,128], index: 1, kind: input, shape index: {}]
  %s2 = inlined_call_operand.hbm [shape: bf16[1,128,128], index: 2, kind: input, shape index: {}]
  %s3 = inlined_call_operand.vmem [shape: f32[1,128], index: 3, kind: input, shape index: {}]
  %s4 = inlined_call_operand.vmem [shape: f32[3,128], index: 4, kind: input, shape index: {}]
  %s5 = inlined_call_operand.hbm [shape: f32[1,1,8], index: 5, kind: output, shape index: {}]
  %s6 = sld [smem:[#allocation0]]
  $region42: #{tpu_custom_call.1} parent=0
    _
  %s8 = ssub.s32 1, %s6
  %s9 = scalar_select 0, %s8, %s6
  $region1: #{tpu_custom_call.1} parent=0
    #allocation2 [shape = 'u8[2048]{0}', space=vmem, size = 0x800, scoped, tag = 'input window, operand 0, single buffered']
    #allocation3 [shape = 's32[1]{0}', space=sflag, size = 0x4, scoped, tag = 'scoped memory for tpu_custom_call.1']
    #allocation4 [shape = 's32[1]{0}', space=sflag, size = 0x4, scoped, tag = 'scoped memory for tpu_custom_call.1']
    #allocation5 [shape = 'u8[32768]{0}', space=vmem, size = 0x8000, scoped, tag = 'input window, operand 1, single buffered']
    #allocation6 [shape = 's32[1]{0}', space=sflag, size = 0x4, scoped, tag = 'scoped memory for tpu_custom_call.1']
    #allocation7 [shape = 'u8[32768]{0}', space=vmem, size = 0x8000, scoped, tag = 'input window, operand 2, single buffered']
    #allocation8 [shape = 'u8[512]{0}', space=vmem, size = 0x400, scoped, tag = 'output window, operand 0, single buffered']
    %10 = vsyncpa [#allocation3], 0
    %11 = vsyncpa [#allocation6], 0
    %12 = vsyncpa [#allocation4], 0
    // Predicated region
    $region2: #{tpu_custom_call.1} parent=1 // pred_check
      _
    $region3: #{tpu_custom_call.1} parent=1 // pred_check_branch
      %14 = sbr.rel (0) target = $region5
    $region4: #{tpu_custom_call.1} parent=1 // pred_region
      %s16 = ssub.s32 64, 64
      %17 = vsyncadd [#allocation3], %s16
      %s19 = sshll.u32 [#allocation2], 4
      %s20 = int_to_ptr.vmem [resolvable:$true] %s19
      %22 = dma.hbm_to_vmem [thread:$0]  %s0, 64, %s20, [#allocation3]
    $region5: #{tpu_custom_call.1} parent=1 // pred_fallthru
      _
    // Predicated region
    $region6: #{tpu_custom_call.1} parent=1 // pred_check
      _
    $region7: #{tpu_custom_call.1} parent=1 // pred_check_branch
      %24 = sbr.rel (0) target = $region9
    $region8: #{tpu_custom_call.1} parent=1 // pred_region
      %s26 = ssub.s32 1024, 1024
      %27 = vsyncadd [#allocation6], %s26
      %s28 = sshll.u32 [#allocation5], 4
      %s29 = int_to_ptr.vmem [resolvable:$true] %s28
      %34 = dma.hbm_to_vmem [thread:$0]  %s1, 1024, %s29, [#allocation6], 64, 64, 4
    $region9: #{tpu_custom_call.1} parent=1 // pred_fallthru
      _
    // Predicated region
    $region10: #{tpu_custom_call.1} parent=1 // pred_check
      _
    $region11: #{tpu_custom_call.1} parent=1 // pred_check_branch
      %36 = sbr.rel (0) target = $region13
    $region12: #{tpu_custom_call.1} parent=1 // pred_region
      %s38 = ssub.s32 1024, 1024
      %39 = vsyncadd [#allocation6], %s38
      %s40 = sshll.u32 [#allocation7], 4
      %s41 = int_to_ptr.vmem [resolvable:$true] %s40
      %46 = dma.hbm_to_vmem [thread:$0]  %s2, 1024, %s41, [#allocation6], 64, 64, 4
    $region13: #{tpu_custom_call.1} parent=1 // pred_fallthru
      _
    // Predicated region
    $region14: #{tpu_custom_call.1} parent=1 // pred_check
      _
    $region15: #{tpu_custom_call.1} parent=1 // pred_check_branch
      %48 = sbr.rel (0) target = $region17
    $region16: #{tpu_custom_call.1} parent=1 // pred_region
      _
    $region17: #{tpu_custom_call.1} parent=1 // pred_fallthru
      _
    // Predicated region
    $region18: #{tpu_custom_call.1} parent=1 // pred_check
      _
    $region19: #{tpu_custom_call.1} parent=1 // pred_check_branch
      %50 = sbr.rel (0) target = $region21
    $region20: #{tpu_custom_call.1} parent=1 // pred_region
      _
    $region21: #{tpu_custom_call.1} parent=1 // pred_fallthru
      _
    // Predicated region
    $region22: #{tpu_custom_call.1} parent=1 // pred_check
      _
    $region23: #{tpu_custom_call.1} parent=1 // pred_check_branch
      %52 = sbr.rel (0) target = $region25
    $region24: #{tpu_custom_call.1} parent=1 // pred_region
      %53 = dma.done [#allocation3], 64
    $region25: #{tpu_custom_call.1} parent=1 // pred_fallthru
      _
    // Predicated region
    $region26: #{tpu_custom_call.1} parent=1 // pred_check
      _
    $region27: #{tpu_custom_call.1} parent=1 // pred_check_branch
      %55 = sbr.rel (0) target = $region29
    $region28: #{tpu_custom_call.1} parent=1 // pred_region
      %56 = dma.done [#allocation6], 1024
    $region29: #{tpu_custom_call.1} parent=1 // pred_fallthru
      _
    // Predicated region
    $region30: #{tpu_custom_call.1} parent=1 // pred_check
      _
    $region31: #{tpu_custom_call.1} parent=1 // pred_check_branch
      %58 = sbr.rel (0) target = $region33
    $region32: #{tpu_custom_call.1} parent=1 // pred_region
      %59 = dma.done [#allocation6], 1024
    $region33: #{tpu_custom_call.1} parent=1 // pred_fallthru
      _
    %v61 = vld [vmem:[#allocation2] sm:$0xf]
    %v62 = vld [vmem:[#allocation5] sm:$0xf]
    %v63 = vld [vmem:[#allocation5 + $0x4] sm:$0xf]
    %v64 = vld [vmem:[#allocation5 + $0x8] sm:$0xf]
    %v65 = vld [vmem:[#allocation5 + $0xc] sm:$0xf]
    %v66 = vld [vmem:[#allocation5 + $0x10] sm:$0xf]
    %v67 = vld [vmem:[#allocation5 + $0x14] sm:$0xf]
    %v68 = vld [vmem:[#allocation5 + $0x18] sm:$0xf]
    %v69 = vld [vmem:[#allocation5 + $0x1c] sm:$0xf]
    %v70 = vld [vmem:[#allocation5 + $0x20] sm:$0xf]
    %v71 = vld [vmem:[#allocation5 + $0x24] sm:$0xf]
    %v72 = vld [vmem:[#allocation5 + $0x28] sm:$0xf]
    %v73 = vld [vmem:[#allocation5 + $0x2c] sm:$0xf]
    %v74 = vld [vmem:[#allocation5 + $0x30] sm:$0xf]
    %v75 = vld [vmem:[#allocation5 + $0x34] sm:$0xf]
    %v76 = vld [vmem:[#allocation5 + $0x38] sm:$0xf]
    %v77 = vld [vmem:[#allocation5 + $0x3c] sm:$0xf]
    %v78 = vld [vmem:[%s4] sm:$0x1]
    %v79 = vlaneseq
    %v80 = vshrl.u32 %v79, 7
    %v81 = vsub.s32 0, %v80
    %v82 = vrot.slane %v78, %v81
    %v99 = vunpack.c.l.b16 %v62
    %v100 = vunpack.c.l.b16 %v63
    %v101 = vunpack.c.l.b16 %v64
    %v102 = vunpack.c.l.b16 %v65
    %v103 = vunpack.c.l.b16 %v66
    %v104 = vunpack.c.l.b16 %v67
    %v105 = vunpack.c.l.b16 %v68
    %v106 = vunpack.c.l.b16 %v69
    %v107 = vunpack.c.l.b16 %v70
    %v108 = vunpack.c.l.b16 %v71
    %v109 = vunpack.c.l.b16 %v72
    %v110 = vunpack.c.l.b16 %v73
    %v111 = vunpack.c.l.b16 %v74
    %v112 = vunpack.c.l.b16 %v75
    %v113 = vunpack.c.l.b16 %v76
    %v114 = vunpack.c.l.b16 %v77
    %v115 = vpack.c.b16 %v100, %v99
    %v116 = vpack.c.b16 %v102, %v101
    %v117 = vpack.c.b16 %v104, %v103
    %v118 = vpack.c.b16 %v106, %v105
    %v119 = vpack.c.b16 %v108, %v107
    %v120 = vpack.c.b16 %v110, %v109
    %v121 = vpack.c.b16 %v112, %v111
    %v122 = vpack.c.b16 %v114, %v113
    %131 = vmatprep.subr.bf16.mxu0 0
    %132 = vmatpush1.bf16.msra.mxu0 %v115
    %133 = vmatprep.subr.bf16.mxu0 0
    %134 = vmatpush1.bf16.msra.mxu0 %v116
    %135 = vmatprep.subr.bf16.mxu0 0
    %136 = vmatpush1.bf16.msra.mxu0 %v117
    %137 = vmatprep.subr.bf16.mxu0 0
    %138 = vmatpush1.bf16.msra.mxu0 %v118
    %139 = vmatprep.subr.bf16.mxu0 0
    %140 = vmatpush1.bf16.msra.mxu0 %v119
    %141 = vmatprep.subr.bf16.mxu0 0
    %142 = vmatpush1.bf16.msra.mxu0 %v120
    %143 = vmatprep.subr.bf16.mxu0 0
    %144 = vmatpush1.bf16.msra.mxu0 %v121
    %145 = vmatprep.subr.bf16.mxu0 0
    %146 = vmatpush1.bf16.msra.mxu0 %v122
    %147 = vmatprep.subr.bf16.mxu0 0
    %148 = vmatpush1.bf16.msra.mxu0 0
    %149 = vmatprep.subr.bf16.mxu0 0
    %150 = vmatpush1.bf16.msra.mxu0 0
    %151 = vmatprep.subr.bf16.mxu0 0
    %152 = vmatpush1.bf16.msra.mxu0 0
    %153 = vmatprep.subr.bf16.mxu0 0
    %154 = vmatpush1.bf16.msra.mxu0 0
    %155 = vmatprep.subr.bf16.mxu0 0
    %156 = vmatpush1.bf16.msra.mxu0 0
    %157 = vmatprep.subr.bf16.mxu0 0
    %158 = vmatpush1.bf16.msra.mxu0 0
    %159 = vmatprep.subr.bf16.mxu0 0
    %160 = vmatpush1.bf16.msra.mxu0 0
    %161 = vmatprep.subr.bf16.mxu0 0
    %162 = vmatpush1.bf16.msra.mxu0 0
    %163 = vmatprep.mubr.bf16.mxu0 0
    %164 = vmatmul.mubr.bf16.gmra.mrb[0].mxu0 %v61
    %v165 = vpop.f32.mrb[0].mxu0
    %v166 = vadd.f32 %v82, %v165
    %v167 = vpop.f32.mrb[0].mxu0
    %v168 = vpop.f32.mrb[0].mxu0
    %v169 = vpop.f32.mrb[0].mxu0
    %170 = vdwg.mxu0
    %v171 = vmax.f32 %v166, 0.0
    %v172 = vld [vmem:[#allocation7] sm:$0xf]
    %v173 = vld [vmem:[#allocation7 + $0x4] sm:$0xf]
    %v174 = vld [vmem:[#allocation7 + $0x8] sm:$0xf]
    %v175 = vld [vmem:[#allocation7 + $0xc] sm:$0xf]
    %v176 = vld [vmem:[#allocation7 + $0x10] sm:$0xf]
    %v177 = vld [vmem:[#allocation7 + $0x14] sm:$0xf]
    %v178 = vld [vmem:[#allocation7 + $0x18] sm:$0xf]
    %v179 = vld [vmem:[#allocation7 + $0x1c] sm:$0xf]
    %v180 = vld [vmem:[#allocation7 + $0x20] sm:$0xf]
    %v181 = vld [vmem:[#allocation7 + $0x24] sm:$0xf]
    %v182 = vld [vmem:[#allocation7 + $0x28] sm:$0xf]
    %v183 = vld [vmem:[#allocation7 + $0x2c] sm:$0xf]
    %v184 = vld [vmem:[#allocation7 + $0x30] sm:$0xf]
    %v185 = vld [vmem:[#allocation7 + $0x34] sm:$0xf]
    %v186 = vld [vmem:[#allocation7 + $0x38] sm:$0xf]
    %v187 = vld [vmem:[#allocation7 + $0x3c] sm:$0xf]
    %v188 = vpack.c.bf16 %v171, %v171
    %v189 = vld [vmem:[%s4 + $0x1] sm:$0x1]
    %v190 = vlaneseq
    %v191 = vshrl.u32 %v190, 7
    %v192 = vsub.s32 0, %v191
    %v193 = vrot.slane %v189, %v192
    %v210 = vunpack.c.l.b16 %v172
    %v211 = vunpack.c.l.b16 %v173
    %v212 = vunpack.c.l.b16 %v174
    %v213 = vunpack.c.l.b16 %v175
    %v214 = vunpack.c.l.b16 %v176
    %v215 = vunpack.c.l.b16 %v177
    %v216 = vunpack.c.l.b16 %v178
    %v217 = vunpack.c.l.b16 %v179
    %v218 = vunpack.c.l.b16 %v180
    %v219 = vunpack.c.l.b16 %v181
    %v220 = vunpack.c.l.b16 %v182
    %v221 = vunpack.c.l.b16 %v183
    %v222 = vunpack.c.l.b16 %v184
    %v223 = vunpack.c.l.b16 %v185
    %v224 = vunpack.c.l.b16 %v186
    %v225 = vunpack.c.l.b16 %v187
    %v226 = vpack.c.b16 %v211, %v210
    %v227 = vpack.c.b16 %v213, %v212
    %v228 = vpack.c.b16 %v215, %v214
    %v229 = vpack.c.b16 %v217, %v216
    %v230 = vpack.c.b16 %v219, %v218
    %v231 = vpack.c.b16 %v221, %v220
    %v232 = vpack.c.b16 %v223, %v222
    %v233 = vpack.c.b16 %v225, %v224
    %242 = vmatprep.subr.bf16.mxu0 0
    %243 = vmatpush1.bf16.msra.mxu0 %v226
    %244 = vmatprep.subr.bf16.mxu0 0
    %245 = vmatpush1.bf16.msra.mxu0 %v227
    %246 = vmatprep.subr.bf16.mxu0 0
    %247 = vmatpush1.bf16.msra.mxu0 %v228
    %248 = vmatprep.subr.bf16.mxu0 0
    %249 = vmatpush1.bf16.msra.mxu0 %v229
    %250 = vmatprep.subr.bf16.mxu0 0
    %251 = vmatpush1.bf16.msra.mxu0 %v230
    %252 = vmatprep.subr.bf16.mxu0 0
    %253 = vmatpush1.bf16.msra.mxu0 %v231
    %254 = vmatprep.subr.bf16.mxu0 0
    %255 = vmatpush1.bf16.msra.mxu0 %v232
    %256 = vmatprep.subr.bf16.mxu0 0
    %257 = vmatpush1.bf16.msra.mxu0 %v233
    %258 = vmatprep.subr.bf16.mxu0 0
    %259 = vmatpush1.bf16.msra.mxu0 0
    %260 = vmatprep.subr.bf16.mxu0 0
    %261 = vmatpush1.bf16.msra.mxu0 0
    %262 = vmatprep.subr.bf16.mxu0 0
    %263 = vmatpush1.bf16.msra.mxu0 0
    %264 = vmatprep.subr.bf16.mxu0 0
    %265 = vmatpush1.bf16.msra.mxu0 0
    %266 = vmatprep.subr.bf16.mxu0 0
    %267 = vmatpush1.bf16.msra.mxu0 0
    %268 = vmatprep.subr.bf16.mxu0 0
    %269 = vmatpush1.bf16.msra.mxu0 0
    %270 = vmatprep.subr.bf16.mxu0 0
    %271 = vmatpush1.bf16.msra.mxu0 0
    %272 = vmatprep.subr.bf16.mxu0 0
    %273 = vmatpush1.bf16.msra.mxu0 0
    %274 = vmatprep.mubr.bf16.mxu0 0
    %275 = vmatmul.mubr.bf16.gmra.mrb[0].mxu0 %v188
    %v276 = vpop.f32.mrb[0].mxu0
    %v277 = vadd.f32 %v193, %v276
    %v278 = vpop.f32.mrb[0].mxu0
    %v279 = vpop.f32.mrb[0].mxu0
    %v280 = vpop.f32.mrb[0].mxu0
    %281 = vdwg.mxu0
    %v282 = vmax.f32 %v277, 0.0
    %v283 = vld [vmem:[%s3] sm:$0x1]
    %v284 = vld [vmem:[%s4 + $0x2] sm:$0x1]
    %v286 = vlaneseq
    %v287 = vshrl.u32 %v286, 7
    %v288 = vsub.s32 0, %v287
    %v289 = vrot.slane %v283, %v288
    %v291 = vmul.f32 %v282, %v289
    %292 = vadd.xlane.f32.xlu0 %v291
    %v293 = vpop.xlane.xlu0 %292
    %v294 = vlaneseq
    %v295 = vshrl.u32 %v294, 7
    %v296 = vsub.s32 0, %v295
    %v297 = vrot.slane %v284, %v296
    %v298 = vadd.f32 %v293, %v297
    %v299 = vxor.u32 %v298, 2147483648
    %v300 = vmul.f32 %v299, 1.442695
    %v301 = vpow.pop %v300
    %v302 = vadd.f32 %v301, 1.0
    %v303 = vrcp.pop %v302
    %v304 = vmul.f32 1.0, %v303
    %305 = vxpose.xlu0.b32.start [1/16] %v304, 128
    %306 = vxpose.xlu0.b32.cont [2/16] 0.0, 128
    %307 = vxpose.xlu0.b32.cont [3/16] 0.0, 128
    %308 = vxpose.xlu0.b32.cont [4/16] 0.0, 128
    %309 = vxpose.xlu0.b32.cont [5/16] 0.0, 128
    %310 = vxpose.xlu0.b32.cont [6/16] 0.0, 128
    %311 = vxpose.xlu0.b32.cont [7/16] 0.0, 128
    %312 = vxpose.xlu0.b32.cont [8/16] 0.0, 128
    %313 = vxpose.xlu0.b32.cont [9/16] 0.0, 128
    %314 = vxpose.xlu0.b32.cont [10/16] 0.0, 128
    %315 = vxpose.xlu0.b32.cont [11/16] 0.0, 128
    %316 = vxpose.xlu0.b32.cont [12/16] 0.0, 128
    %317 = vxpose.xlu0.b32.cont [13/16] 0.0, 128
    %318 = vxpose.xlu0.b32.cont [14/16] 0.0, 128
    %319 = vxpose.xlu0.b32.cont [15/16] 0.0, 128
    %320 = vxpose.xlu0.b32.end [16/16] 0.0, 128
    %v321 = vpop.trf.xlu0
    %v322 = vpop.trf.xlu0
    %v323 = vpop.trf.xlu0
    %v324 = vpop.trf.xlu0
    %v325 = vpop.trf.xlu0
    %v326 = vpop.trf.xlu0
    %v327 = vpop.trf.xlu0
    %v328 = vpop.trf.xlu0
    %v329 = vpop.trf.xlu0
    %v330 = vpop.trf.xlu0
    %v331 = vpop.trf.xlu0
    %v332 = vpop.trf.xlu0
    %v333 = vpop.trf.xlu0
    %v334 = vpop.trf.xlu0
    %v335 = vpop.trf.xlu0
    %v336 = vpop.trf.xlu0
    %vm337 = vcmask 57344
    %338 = vst.msk [vmem:[#allocation8] sm:$0x1] %vm337, %v321
    // Predicated region
    $region34: #{tpu_custom_call.1} parent=1 // pred_check
      _
    $region35: #{tpu_custom_call.1} parent=1 // pred_check_branch
      %340 = sbr.rel (0) target = $region37
    $region36: #{tpu_custom_call.1} parent=1 // pred_region
      %s342 = ssub.s32 16, 16
      %343 = vsyncadd [#allocation4], %s342
      %s345 = sshll.u32 [#allocation8], 4
      %s346 = int_to_ptr.vmem [resolvable:$true] %s345
      %348 = dma.vmem_to_hbm [thread:$0]  %s346, 16, %s5, [#allocation4]
    $region37: #{tpu_custom_call.1} parent=1 // pred_fallthru
      _
    // Predicated region
    $region38: #{tpu_custom_call.1} parent=1 // pred_check
      _
    $region39: #{tpu_custom_call.1} parent=1 // pred_check_branch
      %350 = sbr.rel (0) target = $region41
    $region40: #{tpu_custom_call.1} parent=1 // pred_region
      %351 = dma.done [#allocation4], 16
    $region41: #{tpu_custom_call.1} parent=1 // pred_fallthru
      _
    %352 = vsyncpa [#allocation3], 1
    %353 = vsyncpa [#allocation6], 1
    %354 = vsyncpa [#allocation4], 1

// kernel: tpu_custom_call.1
$region0: #{tpu_custom_call.1}
  #allocation0 [shape = 'u32[]', space=smem, size = 0x4, offset = 0x4, fixed_abs, tag = 'smem constant byte address 0x4 - core index']
  #allocation1 [shape = 'u32[144,128]{1,0:T(1,128)}', space=vmem, size = 0x12000, scoped, tag = 'internal scratch']
  %s0 = inlined_call_operand.hbm [shape: bf16[8,128], index: 0, kind: input, shape index: {}]
  %s1 = inlined_call_operand.hbm [shape: bf16[128,128], index: 1, kind: input, shape index: {}]
  %s2 = inlined_call_operand.hbm [shape: bf16[1,128,128], index: 2, kind: input, shape index: {}]
  %s3 = inlined_call_operand.vmem [shape: f32[1,128], index: 3, kind: input, shape index: {}]
  %s4 = inlined_call_operand.vmem [shape: f32[3,128], index: 4, kind: input, shape index: {}]
  %s5 = inlined_call_operand.vmem [shape: f32[8,1], index: 5, kind: output, shape index: {}]
  %s6 = sld [smem:[#allocation0]]
  $region42: #{tpu_custom_call.1} parent=0
    _
  %s8 = ssub.s32 1, %s6
  %s9 = scalar_select 0, %s8, %s6
  $region1: #{tpu_custom_call.1} parent=0
    #allocation2 [shape = 'u8[2048]{0}', space=vmem, size = 0x800, scoped, tag = 'input window, operand 0, single buffered']
    #allocation3 [shape = 's32[1]{0}', space=sflag, size = 0x4, scoped, tag = 'scoped memory for tpu_custom_call.1']
    #allocation4 [shape = 'u8[32768]{0}', space=vmem, size = 0x8000, scoped, tag = 'input window, operand 1, single buffered']
    #allocation5 [shape = 's32[1]{0}', space=sflag, size = 0x4, scoped, tag = 'scoped memory for tpu_custom_call.1']
    #allocation6 [shape = 'u8[32768]{0}', space=vmem, size = 0x8000, scoped, tag = 'input window, operand 2, single buffered']
    %10 = vsyncpa [#allocation3], 0
    %11 = vsyncpa [#allocation5], 0
    // Predicated region
    $region2: #{tpu_custom_call.1} parent=1 // pred_check
      _
    $region3: #{tpu_custom_call.1} parent=1 // pred_check_branch
      %13 = sbr.rel (0) target = $region5
    $region4: #{tpu_custom_call.1} parent=1 // pred_region
      %s15 = ssub.s32 64, 64
      %16 = vsyncadd [#allocation3], %s15
      %s18 = sshll.u32 [#allocation2], 4
      %s19 = int_to_ptr.vmem [resolvable:$true] %s18
      %21 = dma.hbm_to_vmem [thread:$0]  %s0, 64, %s19, [#allocation3]
    $region5: #{tpu_custom_call.1} parent=1 // pred_fallthru
      _
    // Predicated region
    $region6: #{tpu_custom_call.1} parent=1 // pred_check
      _
    $region7: #{tpu_custom_call.1} parent=1 // pred_check_branch
      %23 = sbr.rel (0) target = $region9
    $region8: #{tpu_custom_call.1} parent=1 // pred_region
      %s25 = ssub.s32 1024, 1024
      %26 = vsyncadd [#allocation5], %s25
      %s27 = sshll.u32 [#allocation4], 4
      %s28 = int_to_ptr.vmem [resolvable:$true] %s27
      %33 = dma.hbm_to_vmem [thread:$0]  %s1, 1024, %s28, [#allocation5], 64, 64, 4
    $region9: #{tpu_custom_call.1} parent=1 // pred_fallthru
      _
    // Predicated region
    $region10: #{tpu_custom_call.1} parent=1 // pred_check
      _
    $region11: #{tpu_custom_call.1} parent=1 // pred_check_branch
      %35 = sbr.rel (0) target = $region13
    $region12: #{tpu_custom_call.1} parent=1 // pred_region
      %s37 = ssub.s32 1024, 1024
      %38 = vsyncadd [#allocation5], %s37
      %s39 = sshll.u32 [#allocation6], 4
      %s40 = int_to_ptr.vmem [resolvable:$true] %s39
      %45 = dma.hbm_to_vmem [thread:$0]  %s2, 1024, %s40, [#allocation5], 64, 64, 4
    $region13: #{tpu_custom_call.1} parent=1 // pred_fallthru
      _
    // Predicated region
    $region14: #{tpu_custom_call.1} parent=1 // pred_check
      _
    $region15: #{tpu_custom_call.1} parent=1 // pred_check_branch
      %47 = sbr.rel (0) target = $region17
    $region16: #{tpu_custom_call.1} parent=1 // pred_region
      _
    $region17: #{tpu_custom_call.1} parent=1 // pred_fallthru
      _
    // Predicated region
    $region18: #{tpu_custom_call.1} parent=1 // pred_check
      _
    $region19: #{tpu_custom_call.1} parent=1 // pred_check_branch
      %49 = sbr.rel (0) target = $region21
    $region20: #{tpu_custom_call.1} parent=1 // pred_region
      _
    $region21: #{tpu_custom_call.1} parent=1 // pred_fallthru
      _
    // Predicated region
    $region22: #{tpu_custom_call.1} parent=1 // pred_check
      _
    $region23: #{tpu_custom_call.1} parent=1 // pred_check_branch
      %51 = sbr.rel (0) target = $region25
    $region24: #{tpu_custom_call.1} parent=1 // pred_region
      %52 = dma.done [#allocation3], 64
    $region25: #{tpu_custom_call.1} parent=1 // pred_fallthru
      _
    // Predicated region
    $region26: #{tpu_custom_call.1} parent=1 // pred_check
      _
    $region27: #{tpu_custom_call.1} parent=1 // pred_check_branch
      %54 = sbr.rel (0) target = $region29
    $region28: #{tpu_custom_call.1} parent=1 // pred_region
      %55 = dma.done [#allocation5], 1024
    $region29: #{tpu_custom_call.1} parent=1 // pred_fallthru
      _
    // Predicated region
    $region30: #{tpu_custom_call.1} parent=1 // pred_check
      _
    $region31: #{tpu_custom_call.1} parent=1 // pred_check_branch
      %57 = sbr.rel (0) target = $region33
    $region32: #{tpu_custom_call.1} parent=1 // pred_region
      %58 = dma.done [#allocation5], 1024
    $region33: #{tpu_custom_call.1} parent=1 // pred_fallthru
      _
    %v60 = vld [vmem:[#allocation2] sm:$0xf]
    %v61 = vld [vmem:[#allocation4] sm:$0xf]
    %v62 = vld [vmem:[#allocation4 + $0x4] sm:$0xf]
    %v63 = vld [vmem:[#allocation4 + $0x8] sm:$0xf]
    %v64 = vld [vmem:[#allocation4 + $0xc] sm:$0xf]
    %v65 = vld [vmem:[#allocation4 + $0x10] sm:$0xf]
    %v66 = vld [vmem:[#allocation4 + $0x14] sm:$0xf]
    %v67 = vld [vmem:[#allocation4 + $0x18] sm:$0xf]
    %v68 = vld [vmem:[#allocation4 + $0x1c] sm:$0xf]
    %v69 = vld [vmem:[#allocation4 + $0x20] sm:$0xf]
    %v70 = vld [vmem:[#allocation4 + $0x24] sm:$0xf]
    %v71 = vld [vmem:[#allocation4 + $0x28] sm:$0xf]
    %v72 = vld [vmem:[#allocation4 + $0x2c] sm:$0xf]
    %v73 = vld [vmem:[#allocation4 + $0x30] sm:$0xf]
    %v74 = vld [vmem:[#allocation4 + $0x34] sm:$0xf]
    %v75 = vld [vmem:[#allocation4 + $0x38] sm:$0xf]
    %v76 = vld [vmem:[#allocation4 + $0x3c] sm:$0xf]
    %v77 = vld [vmem:[%s4] sm:$0x1]
    %v78 = vlaneseq
    %v79 = vshrl.u32 %v78, 7
    %v80 = vsub.s32 0, %v79
    %v81 = vrot.slane %v77, %v80
    %v98 = vunpack.c.l.b16 %v61
    %v99 = vunpack.c.l.b16 %v62
    %v100 = vunpack.c.l.b16 %v63
    %v101 = vunpack.c.l.b16 %v64
    %v102 = vunpack.c.l.b16 %v65
    %v103 = vunpack.c.l.b16 %v66
    %v104 = vunpack.c.l.b16 %v67
    %v105 = vunpack.c.l.b16 %v68
    %v106 = vunpack.c.l.b16 %v69
    %v107 = vunpack.c.l.b16 %v70
    %v108 = vunpack.c.l.b16 %v71
    %v109 = vunpack.c.l.b16 %v72
    %v110 = vunpack.c.l.b16 %v73
    %v111 = vunpack.c.l.b16 %v74
    %v112 = vunpack.c.l.b16 %v75
    %v113 = vunpack.c.l.b16 %v76
    %v114 = vpack.c.b16 %v99, %v98
    %v115 = vpack.c.b16 %v101, %v100
    %v116 = vpack.c.b16 %v103, %v102
    %v117 = vpack.c.b16 %v105, %v104
    %v118 = vpack.c.b16 %v107, %v106
    %v119 = vpack.c.b16 %v109, %v108
    %v120 = vpack.c.b16 %v111, %v110
    %v121 = vpack.c.b16 %v113, %v112
    %130 = vmatprep.subr.bf16.mxu0 0
    %131 = vmatpush1.bf16.msra.mxu0 %v114
    %132 = vmatprep.subr.bf16.mxu0 0
    %133 = vmatpush1.bf16.msra.mxu0 %v115
    %134 = vmatprep.subr.bf16.mxu0 0
    %135 = vmatpush1.bf16.msra.mxu0 %v116
    %136 = vmatprep.subr.bf16.mxu0 0
    %137 = vmatpush1.bf16.msra.mxu0 %v117
    %138 = vmatprep.subr.bf16.mxu0 0
    %139 = vmatpush1.bf16.msra.mxu0 %v118
    %140 = vmatprep.subr.bf16.mxu0 0
    %141 = vmatpush1.bf16.msra.mxu0 %v119
    %142 = vmatprep.subr.bf16.mxu0 0
    %143 = vmatpush1.bf16.msra.mxu0 %v120
    %144 = vmatprep.subr.bf16.mxu0 0
    %145 = vmatpush1.bf16.msra.mxu0 %v121
    %146 = vmatprep.subr.bf16.mxu0 0
    %147 = vmatpush1.bf16.msra.mxu0 0
    %148 = vmatprep.subr.bf16.mxu0 0
    %149 = vmatpush1.bf16.msra.mxu0 0
    %150 = vmatprep.subr.bf16.mxu0 0
    %151 = vmatpush1.bf16.msra.mxu0 0
    %152 = vmatprep.subr.bf16.mxu0 0
    %153 = vmatpush1.bf16.msra.mxu0 0
    %154 = vmatprep.subr.bf16.mxu0 0
    %155 = vmatpush1.bf16.msra.mxu0 0
    %156 = vmatprep.subr.bf16.mxu0 0
    %157 = vmatpush1.bf16.msra.mxu0 0
    %158 = vmatprep.subr.bf16.mxu0 0
    %159 = vmatpush1.bf16.msra.mxu0 0
    %160 = vmatprep.subr.bf16.mxu0 0
    %161 = vmatpush1.bf16.msra.mxu0 0
    %162 = vmatprep.mubr.bf16.mxu0 0
    %163 = vmatmul.mubr.bf16.gmra.mrb[0].mxu0 %v60
    %v164 = vpop.f32.mrb[0].mxu0
    %v165 = vadd.f32 %v81, %v164
    %v166 = vpop.f32.mrb[0].mxu0
    %v167 = vpop.f32.mrb[0].mxu0
    %v168 = vpop.f32.mrb[0].mxu0
    %169 = vdwg.mxu0
    %v170 = vmax.f32 %v165, 0.0
    %v171 = vld [vmem:[#allocation6] sm:$0xf]
    %v172 = vld [vmem:[#allocation6 + $0x4] sm:$0xf]
    %v173 = vld [vmem:[#allocation6 + $0x8] sm:$0xf]
    %v174 = vld [vmem:[#allocation6 + $0xc] sm:$0xf]
    %v175 = vld [vmem:[#allocation6 + $0x10] sm:$0xf]
    %v176 = vld [vmem:[#allocation6 + $0x14] sm:$0xf]
    %v177 = vld [vmem:[#allocation6 + $0x18] sm:$0xf]
    %v178 = vld [vmem:[#allocation6 + $0x1c] sm:$0xf]
    %v179 = vld [vmem:[#allocation6 + $0x20] sm:$0xf]
    %v180 = vld [vmem:[#allocation6 + $0x24] sm:$0xf]
    %v181 = vld [vmem:[#allocation6 + $0x28] sm:$0xf]
    %v182 = vld [vmem:[#allocation6 + $0x2c] sm:$0xf]
    %v183 = vld [vmem:[#allocation6 + $0x30] sm:$0xf]
    %v184 = vld [vmem:[#allocation6 + $0x34] sm:$0xf]
    %v185 = vld [vmem:[#allocation6 + $0x38] sm:$0xf]
    %v186 = vld [vmem:[#allocation6 + $0x3c] sm:$0xf]
    %v187 = vpack.c.bf16 %v170, %v170
    %v188 = vld [vmem:[%s4 + $0x1] sm:$0x1]
    %v189 = vlaneseq
    %v190 = vshrl.u32 %v189, 7
    %v191 = vsub.s32 0, %v190
    %v192 = vrot.slane %v188, %v191
    %v209 = vunpack.c.l.b16 %v171
    %v210 = vunpack.c.l.b16 %v172
    %v211 = vunpack.c.l.b16 %v173
    %v212 = vunpack.c.l.b16 %v174
    %v213 = vunpack.c.l.b16 %v175
    %v214 = vunpack.c.l.b16 %v176
    %v215 = vunpack.c.l.b16 %v177
    %v216 = vunpack.c.l.b16 %v178
    %v217 = vunpack.c.l.b16 %v179
    %v218 = vunpack.c.l.b16 %v180
    %v219 = vunpack.c.l.b16 %v181
    %v220 = vunpack.c.l.b16 %v182
    %v221 = vunpack.c.l.b16 %v183
    %v222 = vunpack.c.l.b16 %v184
    %v223 = vunpack.c.l.b16 %v185
    %v224 = vunpack.c.l.b16 %v186
    %v225 = vpack.c.b16 %v210, %v209
    %v226 = vpack.c.b16 %v212, %v211
    %v227 = vpack.c.b16 %v214, %v213
    %v228 = vpack.c.b16 %v216, %v215
    %v229 = vpack.c.b16 %v218, %v217
    %v230 = vpack.c.b16 %v220, %v219
    %v231 = vpack.c.b16 %v222, %v221
    %v232 = vpack.c.b16 %v224, %v223
    %241 = vmatprep.subr.bf16.mxu0 0
    %242 = vmatpush1.bf16.msra.mxu0 %v225
    %243 = vmatprep.subr.bf16.mxu0 0
    %244 = vmatpush1.bf16.msra.mxu0 %v226
    %245 = vmatprep.subr.bf16.mxu0 0
    %246 = vmatpush1.bf16.msra.mxu0 %v227
    %247 = vmatprep.subr.bf16.mxu0 0
    %248 = vmatpush1.bf16.msra.mxu0 %v228
    %249 = vmatprep.subr.bf16.mxu0 0
    %250 = vmatpush1.bf16.msra.mxu0 %v229
    %251 = vmatprep.subr.bf16.mxu0 0
    %252 = vmatpush1.bf16.msra.mxu0 %v230
    %253 = vmatprep.subr.bf16.mxu0 0
    %254 = vmatpush1.bf16.msra.mxu0 %v231
    %255 = vmatprep.subr.bf16.mxu0 0
    %256 = vmatpush1.bf16.msra.mxu0 %v232
    %257 = vmatprep.subr.bf16.mxu0 0
    %258 = vmatpush1.bf16.msra.mxu0 0
    %259 = vmatprep.subr.bf16.mxu0 0
    %260 = vmatpush1.bf16.msra.mxu0 0
    %261 = vmatprep.subr.bf16.mxu0 0
    %262 = vmatpush1.bf16.msra.mxu0 0
    %263 = vmatprep.subr.bf16.mxu0 0
    %264 = vmatpush1.bf16.msra.mxu0 0
    %265 = vmatprep.subr.bf16.mxu0 0
    %266 = vmatpush1.bf16.msra.mxu0 0
    %267 = vmatprep.subr.bf16.mxu0 0
    %268 = vmatpush1.bf16.msra.mxu0 0
    %269 = vmatprep.subr.bf16.mxu0 0
    %270 = vmatpush1.bf16.msra.mxu0 0
    %271 = vmatprep.subr.bf16.mxu0 0
    %272 = vmatpush1.bf16.msra.mxu0 0
    %273 = vmatprep.mubr.bf16.mxu0 0
    %274 = vmatmul.mubr.bf16.gmra.mrb[0].mxu0 %v187
    %v275 = vpop.f32.mrb[0].mxu0
    %v276 = vadd.f32 %v192, %v275
    %v277 = vpop.f32.mrb[0].mxu0
    %v278 = vpop.f32.mrb[0].mxu0
    %v279 = vpop.f32.mrb[0].mxu0
    %280 = vdwg.mxu0
    %v281 = vmax.f32 %v276, 0.0
    %v282 = vld [vmem:[%s3] sm:$0x1]
    %v283 = vld [vmem:[%s4 + $0x2] sm:$0x1]
    %v285 = vlaneseq
    %v286 = vshrl.u32 %v285, 7
    %v287 = vsub.s32 0, %v286
    %v288 = vrot.slane %v282, %v287
    %v290 = vmul.f32 %v281, %v288
    %291 = vadd.xlane.f32.xlu0 %v290
    %v292 = vpop.xlane.xlu0 %291
    %v293 = vlaneseq
    %v294 = vshrl.u32 %v293, 7
    %v295 = vsub.s32 0, %v294
    %v296 = vrot.slane %v283, %v295
    %v297 = vadd.f32 %v292, %v296
    %v298 = vxor.u32 %v297, 2147483648
    %v299 = vmul.f32 %v298, 1.442695
    %v300 = vpow.pop %v299
    %v301 = vadd.f32 %v300, 1.0
    %v302 = vrcp.pop %v301
    %v303 = vmul.f32 1.0, %v302
    %vm304 = vcmask 7168
    %305 = vst.msk [vmem:[%s5] sm:$0xff] %vm304, %v303
    // Predicated region
    $region34: #{tpu_custom_call.1} parent=1 // pred_check
      _
    $region35: #{tpu_custom_call.1} parent=1 // pred_check_branch
      %307 = sbr.rel (0) target = $region37
    $region36: #{tpu_custom_call.1} parent=1 // pred_region
      _
    $region37: #{tpu_custom_call.1} parent=1 // pred_fallthru
      _
    // Predicated region
    $region38: #{tpu_custom_call.1} parent=1 // pred_check
      _
    $region39: #{tpu_custom_call.1} parent=1 // pred_check_branch
      %309 = sbr.rel (0) target = $region41
    $region40: #{tpu_custom_call.1} parent=1 // pred_region
      _
    $region41: #{tpu_custom_call.1} parent=1 // pred_fallthru
      _
    %310 = vsyncpa [#allocation3], 1
    %311 = vsyncpa [#allocation5], 1

</llo_original>
